<compile_context>
chip_gen: v7x
topology: tpu7x:2x2x1
jax: 0.10.0
libtpu: 0.0.40
codegen_flags: <defaults>
</compile_context>

<pallas_src>
import jax
import jax.numpy as jnp
from jax.experimental import pallas as pl
from jax.experimental.pallas import tpu as pltpu


def _fused_kernel(x_ref, a_ref, w_ref, b_ref, o_ref):
    """Fused blur -> conv for one grid step (NB batch elements folded into M = NB*H).

    x_ref: (1, M, W*C)       channels-folded activations
    a_ref: (3, M, M)         per conv-dy tap: (dy shift + conv y-pad) o (vertical blur + blur y-pad),
                             block-diagonal over the NB folded batch elements
    w_ref: (3, W*C, W*Cout)  per conv-dy tap: (horizontal blur/16 + pad) o (conv dx taps + pad) o weights
    b_ref: (1, W*Cout)       bias tiled over W
    o_ref: (1, M, W*Cout)    channels-folded output (lane-dense, W*Cout multiple of 128 here)
    """
    x = x_ref[0].astype(jnp.float32)
    acc = jnp.zeros((x_ref.shape[1], w_ref.shape[2]), jnp.float32)
    for t in range(3):  # static unroll: 3 x (MXU matmul pair), no scratch, no padding, no masked stores
        v = jnp.dot(a_ref[t], x, preferred_element_type=jnp.float32)
        acc = acc + jnp.dot(v, w_ref[t], preferred_element_type=jnp.float32)
    o_ref[0] = (acc + b_ref[...].astype(jnp.float32)).astype(o_ref.dtype)


def _band(n, coeffs):
    """n x n banded matrix: entry [i, j] = coeffs[j - i + 1] for |j - i| <= 1, else 0."""
    i = jnp.arange(n)
    d = i[None, :] - i[:, None]          # column - row
    m = jnp.zeros((n, n), jnp.float32)
    for c, off in zip(coeffs, (-1, 0, 1)):
        m = m + jnp.float32(c) * (d == off).astype(jnp.float32)
    return m


def _pick_nb(N, H):
    """Batch elements folded per grid step: target M = NB*H >= 128, keep >= 2 grid steps for v7x."""
    nb = min(N, max(1, 128 // max(H, 1)))
    if N >= 2 and N // nb < 2:
        nb = max(1, N // 2)
    while N % nb:
        nb -= 1
    return nb


@jax.jit
def blurpool_conv2d(x_nchw, conv_weight_oihw, conv_bias):
    """Forward pass of BlurPoolConv2d. x: (N,C,H,W), weight: (Cout,C,3,3), bias: (Cout,)."""
    N, C, H, W = x_nchw.shape
    Cout = conv_weight_oihw.shape[0]
    dtype = x_nchw.dtype
    NB = _pick_nb(N, H)
    G, M = N // NB, NB * H

    # --- wrapper glue: NCHW -> channels-folded (G, NB*H, W*C) ---
    x_f = jnp.transpose(x_nchw, (0, 2, 3, 1)).reshape(G, M, W * C)

    # --- LHS banded matrices (one per conv dy tap): S_dy @ Bv, block-diagonal over NB ---
    bv = _band(H, (1., 2., 1.))                                    # vertical [1,2,1] blur, y zero-pad implicit
    shifts_y = jnp.stack([_band(H, (1., 0., 0.)),                  # conv dy = -1 (conv y zero-pad implicit)
                          _band(H, (0., 1., 0.)),                  # conv dy =  0
                          _band(H, (0., 0., 1.))])                 # conv dy = +1
    a_small = jnp.einsum('tij,jk->tik', shifts_y, bv)              # (3, H, H)
    if NB > 1:
        eye_nb = jnp.eye(NB, dtype=jnp.float32)
        a_full = jnp.stack([jnp.kron(eye_nb, a_small[t]) for t in range(3)])
    else:
        a_full = a_small                                           # (3, M, M)

    # --- RHS matrices (one per conv dy tap): horizontal blur (incl. 1/16) o conv dx taps o weights ---
    mh = jnp.kron(_band(W, (1., 2., 1.)) / 16.0,
                  jnp.eye(C, dtype=jnp.float32))                   # (W*C, W*C), blur x zero-pad implicit
    wd = jnp.transpose(conv_weight_oihw, (2, 3, 1, 0)).astype(jnp.float32)   # (dy, dx, c, co)
    shifts_x = jnp.stack([_band(W, (0., 0., 1.)),                  # conv dx = -1 (conv x zero-pad implicit)
                          _band(W, (0., 1., 0.)),                  # conv dx =  0
                          _band(W, (1., 0., 0.))])                 # conv dx = +1
    mc = jnp.einsum('xab,yxco->yacbo', shifts_x, wd).reshape(3, W * C, W * Cout)
    w_full = jnp.einsum('jk,tkl->tjl', mh, mc)                     # (3, W*C, W*Cout)

    b_row = jnp.tile(conv_bias.astype(jnp.float32), W).reshape(1, W * Cout)

    out_f = pl.pallas_call(
        _fused_kernel,
        out_shape=jax.ShapeDtypeStruct((G, M, W * Cout), dtype),
        grid=(G,),
        in_specs=[pl.BlockSpec((1, M, W * C), lambda g: (g, 0, 0)),
                  pl.BlockSpec((3, M, M), lambda g: (0, 0, 0)),
                  pl.BlockSpec((3, W * C, W * Cout), lambda g: (0, 0, 0)),
                  pl.BlockSpec((1, W * Cout), lambda g: (0, 0))],
        out_specs=pl.BlockSpec((1, M, W * Cout), lambda g: (g, 0, 0)),
        compiler_params=pltpu.CompilerParams(dimension_semantics=("parallel",)),
    )(x_f, a_full, w_full, b_row)

    # --- wrapper glue: unfold (G, NB*H, W*Cout) -> NCHW ---
    return jnp.transpose(out_f.reshape(N, H, W, Cout), (0, 3, 1, 2))


def _reference(x_nchw, conv_weight_oihw, conv_bias):
    """Pure-JAX reference mirroring the PyTorch forward exactly (NCHW, cross-correlation)."""
    C = x_nchw.shape[1]
    filt = jnp.array([[1., 2., 1.], [2., 4., 2.], [1., 2., 1.]], jnp.float32) / 16.0
    filt = jnp.tile(filt[None, None], (C, 1, 1, 1))                 # (C, 1, 3, 3)
    blurred = jax.lax.conv_general_dilated(
        x_nchw, filt, window_strides=(1, 1), padding=((1, 1), (1, 1)),
        dimension_numbers=("NCHW", "OIHW", "NCHW"), feature_group_count=C)
    out = jax.lax.conv_general_dilated(
        blurred, conv_weight_oihw, window_strides=(1, 1), padding=((1, 1), (1, 1)),
        dimension_numbers=("NCHW", "OIHW", "NCHW"))
    return out + conv_bias.reshape(1, -1, 1, 1)


if __name__ == "__main__":
    N, C, H, W, Cout = 2, 4, 16, 16, 8

    key = jax.random.PRNGKey(0)
    kx, kw, kb = jax.random.split(key, 3)
    x = jax.random.normal(kx, (N, C, H, W), dtype=jnp.float32)
    conv_weight = 0.1 * jax.random.normal(kw, (Cout, C, 3, 3), dtype=jnp.float32)
    conv_bias = 0.1 * jax.random.normal(kb, (Cout,), dtype=jnp.float32)

    out = jax.block_until_ready(blurpool_conv2d(x, conv_weight, conv_bias))
    ref = jax.block_until_ready(_reference(x, conv_weight, conv_bias))

    assert out.shape == (N, Cout, H, W), out.shape
    max_err = float(jnp.max(jnp.abs(out - ref)))
    assert jnp.allclose(out, ref, atol=1e-4, rtol=1e-4), max_err
    print("KERNEL_OK")
</pallas_src>

<mosaic_0001>
module attributes {stable_mosaic.version = 11 : i64} {
  func.func @_fused_kernel(%arg0: i32, %arg1: memref<1x16x64xf32, #tpu.memory_space<vmem>>, %arg2: memref<3x16x16xf32, #tpu.memory_space<vmem>>, %arg3: memref<3x64x128xf32, #tpu.memory_space<vmem>>, %arg4: memref<1x128xf32, #tpu.memory_space<vmem>>, %arg5: memref<1x16x128xf32, #tpu.memory_space<vmem>>) attributes {dimension_semantics = [#tpu.dimension_semantics<parallel>], iteration_bounds = array<i64: 2>, scalar_prefetch = 0 : i64, scratch_operands = 0 : i64, tpu.core_type = #tpu.core_type<tc>, window_params = [{transform_indices = @transform_0, window_bounds = array<i64: 1, 16, 64>}, {pipeline_mode = #tpu.pipeline_mode<synchronous>, transform_indices = @transform_1, window_bounds = array<i64: 3, 16, 16>}, {pipeline_mode = #tpu.pipeline_mode<synchronous>, transform_indices = @transform_2, window_bounds = array<i64: 3, 64, 128>}, {pipeline_mode = #tpu.pipeline_mode<synchronous>, transform_indices = @transform_3, window_bounds = array<i64: 1, 128>}, {transform_indices = @transform_4, window_bounds = array<i64: 1, 16, 128>}]} {
    %c0 = arith.constant 0 : index
    %c0_0 = arith.constant 0 : index
    %c0_1 = arith.constant 0 : index
    %0 = vector.load %arg1[%c0, %c0_0, %c0_1] : memref<1x16x64xf32, #tpu.memory_space<vmem>>, vector<1x16x64xf32>
    %1 = vector.shape_cast %0 : vector<1x16x64xf32> to vector<16x64xf32>
    %cst = arith.constant 0.000000e+00 : f32
    %2 = vector.broadcast %cst : f32 to vector<16x128xf32>
    %c0_2 = arith.constant 0 : index
    %c0_3 = arith.constant 0 : index
    %c0_4 = arith.constant 0 : index
    %3 = vector.load %arg2[%c0_2, %c0_3, %c0_4] : memref<3x16x16xf32, #tpu.memory_space<vmem>>, vector<1x16x16xf32>
    %4 = vector.shape_cast %3 : vector<1x16x16xf32> to vector<16x16xf32>
    %cst_5 = arith.constant dense<0.000000e+00> : vector<16x64xf32>
    %5 = tpu.matmul %4, %1, %cst_5 {dimension_numbers = #tpu.dot_dimension_numbers<[1], [0], [0], [1], [0, 0, 1, 1], [], []>} : vector<16x16xf32>, vector<16x64xf32>, vector<16x64xf32> -> vector<16x64xf32>
    %c0_6 = arith.constant 0 : index
    %c0_7 = arith.constant 0 : index
    %c0_8 = arith.constant 0 : index
    %6 = vector.load %arg3[%c0_6, %c0_7, %c0_8] : memref<3x64x128xf32, #tpu.memory_space<vmem>>, vector<1x64x128xf32>
    %7 = vector.shape_cast %6 : vector<1x64x128xf32> to vector<64x128xf32>
    %cst_9 = arith.constant dense<0.000000e+00> : vector<16x128xf32>
    %8 = tpu.matmul %5, %7, %cst_9 {dimension_numbers = #tpu.dot_dimension_numbers<[1], [0], [0], [1], [0, 0, 1, 1], [], []>} : vector<16x64xf32>, vector<64x128xf32>, vector<16x128xf32> -> vector<16x128xf32>
    %9 = arith.addf %2, %8 : vector<16x128xf32>
    %c1 = arith.constant 1 : index
    %c0_10 = arith.constant 0 : index
    %c0_11 = arith.constant 0 : index
    %10 = vector.load %arg2[%c1, %c0_10, %c0_11] : memref<3x16x16xf32, #tpu.memory_space<vmem>>, vector<1x16x16xf32>
    %11 = vector.shape_cast %10 : vector<1x16x16xf32> to vector<16x16xf32>
    %cst_12 = arith.constant dense<0.000000e+00> : vector<16x64xf32>
    %12 = tpu.matmul %11, %1, %cst_12 {dimension_numbers = #tpu.dot_dimension_numbers<[1], [0], [0], [1], [0, 0, 1, 1], [], []>} : vector<16x16xf32>, vector<16x64xf32>, vector<16x64xf32> -> vector<16x64xf32>
    %c1_13 = arith.constant 1 : index
    %c0_14 = arith.constant 0 : index
    %c0_15 = arith.constant 0 : index
    %13 = vector.load %arg3[%c1_13, %c0_14, %c0_15] : memref<3x64x128xf32, #tpu.memory_space<vmem>>, vector<1x64x128xf32>
    %14 = vector.shape_cast %13 : vector<1x64x128xf32> to vector<64x128xf32>
    %cst_16 = arith.constant dense<0.000000e+00> : vector<16x128xf32>
    %15 = tpu.matmul %12, %14, %cst_16 {dimension_numbers = #tpu.dot_dimension_numbers<[1], [0], [0], [1], [0, 0, 1, 1], [], []>} : vector<16x64xf32>, vector<64x128xf32>, vector<16x128xf32> -> vector<16x128xf32>
    %16 = arith.addf %9, %15 : vector<16x128xf32>
    %c2 = arith.constant 2 : index
    %c0_17 = arith.constant 0 : index
    %c0_18 = arith.constant 0 : index
    %17 = vector.load %arg2[%c2, %c0_17, %c0_18] : memref<3x16x16xf32, #tpu.memory_space<vmem>>, vector<1x16x16xf32>
    %18 = vector.shape_cast %17 : vector<1x16x16xf32> to vector<16x16xf32>
    %cst_19 = arith.constant dense<0.000000e+00> : vector<16x64xf32>
    %19 = tpu.matmul %18, %1, %cst_19 {dimension_numbers = #tpu.dot_dimension_numbers<[1], [0], [0], [1], [0, 0, 1, 1], [], []>} : vector<16x16xf32>, vector<16x64xf32>, vector<16x64xf32> -> vector<16x64xf32>
    %c2_20 = arith.constant 2 : index
    %c0_21 = arith.constant 0 : index
    %c0_22 = arith.constant 0 : index
    %20 = vector.load %arg3[%c2_20, %c0_21, %c0_22] : memref<3x64x128xf32, #tpu.memory_space<vmem>>, vector<1x64x128xf32>
    %21 = vector.shape_cast %20 : vector<1x64x128xf32> to vector<64x128xf32>
    %cst_23 = arith.constant dense<0.000000e+00> : vector<16x128xf32>
    %22 = tpu.matmul %19, %21, %cst_23 {dimension_numbers = #tpu.dot_dimension_numbers<[1], [0], [0], [1], [0, 0, 1, 1], [], []>} : vector<16x64xf32>, vector<64x128xf32>, vector<16x128xf32> -> vector<16x128xf32>
    %23 = arith.addf %16, %22 : vector<16x128xf32>
    %c0_24 = arith.constant 0 : index
    %c0_25 = arith.constant 0 : index
    %24 = vector.load %arg4[%c0_24, %c0_25] : memref<1x128xf32, #tpu.memory_space<vmem>>, vector<1x128xf32>
    %25 = vector.broadcast %24 : vector<1x128xf32> to vector<16x128xf32>
    %26 = arith.addf %23, %25 : vector<16x128xf32>
    %c0_26 = arith.constant 0 : index
    %c0_27 = arith.constant 0 : index
    %c0_28 = arith.constant 0 : index
    %27 = vector.load %arg5[%c0_26, %c0_27, %c0_28] : memref<1x16x128xf32, #tpu.memory_space<vmem>>, vector<1x16x128xf32>
    %28 = vector.shape_cast %27 : vector<1x16x128xf32> to vector<16x128xf32>
    %29 = vector.shape_cast %26 : vector<16x128xf32> to vector<1x16x128xf32>
    tpu.vector_store %arg5[%c0_26, %c0_27, %c0_28], %29 {strides = array<i32>} : memref<1x16x128xf32, #tpu.memory_space<vmem>>, vector<1x16x128xf32>,
    return
  }
  func.func @transform_0(%arg0: i32) -> (i32, i32, i32) {
    %c0_i32 = arith.constant 0 : i32
    %c0_i32_0 = arith.constant 0 : i32
    %c0_i32_1 = arith.constant 0 : i32
    return %arg0, %c0_i32, %c0_i32_0 : i32, i32, i32
  }
  func.func @transform_1(%arg0: i32) -> (i32, i32, i32) {
    %c0_i32 = arith.constant 0 : i32
    %c0_i32_0 = arith.constant 0 : i32
    %c0_i32_1 = arith.constant 0 : i32
    %c0_i32_2 = arith.constant 0 : i32
    return %c0_i32, %c0_i32_0, %c0_i32_1 : i32, i32, i32
  }
  func.func @transform_2(%arg0: i32) -> (i32, i32, i32) {
    %c0_i32 = arith.constant 0 : i32
    %c0_i32_0 = arith.constant 0 : i32
    %c0_i32_1 = arith.constant 0 : i32
    %c0_i32_2 = arith.constant 0 : i32
    return %c0_i32, %c0_i32_0, %c0_i32_1 : i32, i32, i32
  }
  func.func @transform_3(%arg0: i32) -> (i32, i32) {
    %c0_i32 = arith.constant 0 : i32
    %c0_i32_0 = arith.constant 0 : i32
    %c0_i32_1 = arith.constant 0 : i32
    return %c0_i32, %c0_i32_0 : i32, i32
  }
  func.func @transform_4(%arg0: i32) -> (i32, i32, i32) {
    %c0_i32 = arith.constant 0 : i32
    %c0_i32_0 = arith.constant 0 : i32
    %c0_i32_1 = arith.constant 0 : i32
    return %arg0, %c0_i32, %c0_i32_0 : i32, i32, i32
  }
}

</mosaic_0001>

<llo_original>
// kernel: tile.8
$region0: #{tile.8}
  #allocation0 [shape = 's32[1]{0}', space=sflag, size = 0x4, scoped, tag = 'scoped memory for tile.8']
  %s0 = inlined_call_operand.vmem [shape: f32[8], index: 0, kind: input, shape index: {}]
  %s1 = inlined_call_operand.vmem [shape: f32[16,8], index: 1, kind: output, shape index: {}]
  // Predicated region
  $region2: #{tile.8} parent=0 // pred_check
    _
  $region3: #{tile.8} parent=0 // pred_check_branch
    %3 = sbr.rel (0) target = $region5
  $region4: #{tile.8} parent=0 // pred_region
    _
  $region5: #{tile.8} parent=0 // pred_fallthru
    _
  %v4 = vld [vmem:[%s0] ss:$0 sm:$0xff]
  %5 = vst [vmem:[%s1] sm:$0xff] %v4
  %s6 = scalar_lea.vmem %s1, 8
  %7 = vst [vmem:[%s6] sm:$0xff] %v4

// kernel: tile.9
$region0: #{tile.9}
  %s0 = inlined_call_operand.vmem [shape: f32[16,8], index: 0, kind: input, shape index: {}]
  %s1 = inlined_call_operand.vmem [shape: f32[1,128], index: 1, kind: output, shape index: {}]
  $region1: #{tile.9} parent=0
    #allocation0 [shape = 'u8[4096]{0}', space=vmem, size = 0x1000, scoped, tag = 'scoped mem for output reshape']
    %v2 = vld [vmem:[%s0] sm:$0x1]
    %vm3 = vcmask 64512
    %4 = vst.msk [vmem:[#allocation0] sm:$0x1] %vm3, %v2
    %s5 = scalar_lea.vmem %s0, 15
    %v6 = vld [vmem:[%s5] sm:$0x1]
    %7 = vrot.lane.b32.xlu0 %v6, 120
    %v8 = vpop.permute.xlu0 %7
    %vm9 = vcmask 1048512
    %10 = vst.msk [vmem:[#allocation0] sm:$0x1] %vm9, %v8
    %s11 = scalar_lea.vmem %s0, 14
    %v12 = vld [vmem:[%s11] sm:$0x1]
    %13 = vrot.lane.b32.xlu0 %v12, 112
    %v14 = vpop.permute.xlu0 %13
    %vm15 = vcmask 982912
    %16 = vst.msk [vmem:[#allocation0] sm:$0x1] %vm15, %v14
    %s17 = scalar_lea.vmem %s0, 13
    %v18 = vld [vmem:[%s17] sm:$0x1]
    %19 = vrot.lane.b32.xlu0 %v18, 104
    %v20 = vpop.permute.xlu0 %19
    %vm21 = vcmask 917312
    %22 = vst.msk [vmem:[#allocation0] sm:$0x1] %vm21, %v20
    %s23 = scalar_lea.vmem %s0, 12
    %v24 = vld [vmem:[%s23] sm:$0x1]
    %25 = vrot.lane.b32.xlu0 %v24, 96
    %v26 = vpop.permute.xlu0 %25
    %vm27 = vcmask 851712
    %28 = vst.msk [vmem:[#allocation0] sm:$0x1] %vm27, %v26
    %s29 = scalar_lea.vmem %s0, 11
    %v30 = vld [vmem:[%s29] sm:$0x1]
    %31 = vrot.lane.b32.xlu0 %v30, 88
    %v32 = vpop.permute.xlu0 %31
    %vm33 = vcmask 786112
    %34 = vst.msk [vmem:[#allocation0] sm:$0x1] %vm33, %v32
    %s35 = scalar_lea.vmem %s0, 10
    %v36 = vld [vmem:[%s35] sm:$0x1]
    %37 = vrot.lane.b32.xlu0 %v36, 80
    %v38 = vpop.permute.xlu0 %37
    %vm39 = vcmask 720512
    %40 = vst.msk [vmem:[#allocation0] sm:$0x1] %vm39, %v38
    %s41 = scalar_lea.vmem %s0, 9
    %v42 = vld [vmem:[%s41] sm:$0x1]
    %43 = vrot.lane.b32.xlu0 %v42, 72
    %v44 = vpop.permute.xlu0 %43
    %vm45 = vcmask 654912
    %46 = vst.msk [vmem:[#allocation0] sm:$0x1] %vm45, %v44
    %s47 = scalar_lea.vmem %s0, 8
    %v48 = vld [vmem:[%s47] sm:$0x1]
    %49 = vrot.lane.b32.xlu0 %v48, 64
    %v50 = vpop.permute.xlu0 %49
    %vm51 = vcmask 589312
    %52 = vst.msk [vmem:[#allocation0] sm:$0x1] %vm51, %v50
    %s53 = scalar_lea.vmem %s0, 7
    %v54 = vld [vmem:[%s53] sm:$0x1]
    %55 = vrot.lane.b32.xlu0 %v54, 56
    %v56 = vpop.permute.xlu0 %55
    %vm57 = vcmask 523712
    %58 = vst.msk [vmem:[#allocation0] sm:$0x1] %vm57, %v56
    %s59 = scalar_lea.vmem %s0, 6
    %v60 = vld [vmem:[%s59] sm:$0x1]
    %61 = vrot.lane.b32.xlu0 %v60, 48
    %v62 = vpop.permute.xlu0 %61
    %vm63 = vcmask 458112
    %64 = vst.msk [vmem:[#allocation0] sm:$0x1] %vm63, %v62
    %s65 = scalar_lea.vmem %s0, 5
    %v66 = vld [vmem:[%s65] sm:$0x1]
    %67 = vrot.lane.b32.xlu0 %v66, 40
    %v68 = vpop.permute.xlu0 %67
    %vm69 = vcmask 392512
    %70 = vst.msk [vmem:[#allocation0] sm:$0x1] %vm69, %v68
    %s71 = scalar_lea.vmem %s0, 4
    %v72 = vld [vmem:[%s71] sm:$0x1]
    %73 = vrot.lane.b32.xlu0 %v72, 32
    %v74 = vpop.permute.xlu0 %73
    %vm75 = vcmask 326912
    %76 = vst.msk [vmem:[#allocation0] sm:$0x1] %vm75, %v74
    %s77 = scalar_lea.vmem %s0, 3
    %v78 = vld [vmem:[%s77] sm:$0x1]
    %79 = vrot.lane.b32.xlu0 %v78, 24
    %v80 = vpop.permute.xlu0 %79
    %vm81 = vcmask 261312
    %82 = vst.msk [vmem:[#allocation0] sm:$0x1] %vm81, %v80
    %s83 = scalar_lea.vmem %s0, 2
    %v84 = vld [vmem:[%s83] sm:$0x1]
    %85 = vrot.lane.b32.xlu0 %v84, 16
    %v86 = vpop.permute.xlu0 %85
    %vm87 = vcmask 195712
    %88 = vst.msk [vmem:[#allocation0] sm:$0x1] %vm87, %v86
    %s89 = scalar_lea.vmem %s0, 1
    %v90 = vld [vmem:[%s89] sm:$0x1]
    %91 = vrot.lane.b32.xlu0 %v90, 8
    %v92 = vpop.permute.xlu0 %91
    %vm93 = vcmask 130112
    %94 = vst.msk [vmem:[#allocation0] sm:$0x1] %vm93, %v92
    %s96 = sshllo.u32 0, 1
    %v98 = vld [vmem:[#allocation0] sm:%s96]
    %s99 = sshllo.u32 0, 1
    %100 = vst [vmem:[%s1] sm:%s99] %v98

// kernel: blurpool_conv2d.1
$region0: #{blurpool_conv2d.1}
  #allocation0 [shape = 'u32[]', space=smem, size = 0x4, offset = 0x4, fixed_abs, tag = 'smem constant byte address 0x4 - core index']
  #allocation1 [shape = 'u32[144,128]{1,0:T(1,128)}', space=vmem, size = 0x12000, scoped, tag = 'internal scratch']
  %s0 = inlined_call_operand.vmem [shape: f32[2,16,64], index: 0, kind: input, shape index: {}]
  %s1 = inlined_call_operand.vmem [shape: f32[3,16,16], index: 1, kind: input, shape index: {}]
  %s2 = inlined_call_operand.vmem [shape: f32[3,64,128], index: 2, kind: input, shape index: {}]
  %s3 = inlined_call_operand.vmem [shape: f32[1,128], index: 3, kind: input, shape index: {}]
  %s4 = inlined_call_operand.vmem [shape: f32[2,16,128], index: 4, kind: output, shape index: {}]
  %s5 = sld [smem:[#allocation0]]
  $region49: #{blurpool_conv2d.1} parent=0
    _
  %s7 = ssub.s32 1, %s5
  %s8 = scalar_select 0, %s7, %s5
  loop: start=0, step=1, limit=4
  $region2: #{blurpool_conv2d.1} parent=0 // loop_pre_header
    _
  $region3: #{blurpool_conv2d.1} parent=0 // loop_header
    %s10 = sphi 0, %s14
    %p11 = scmp.ge.s32.totalorder %s10, 4
    %s20 = sphi 0, %s22
    %s23 = sphi 0, %s20
    %s24 = sphi 0, %s23
    %s40 = sphi 0, %s24
    %s44 = sphi 0, %s44
    %s46 = sphi 0, %s44
    %s47 = sphi 0, %s46
    %s61 = sphi 0, %s47
    %s65 = sphi 0, %s65
    %s67 = sphi 0, %s65
    %s68 = sphi 0, %s67
    %s82 = sphi 0, %s68
    %s86 = sphi 0, %s86
    %s88 = sphi 0, %s86
    %s89 = sphi 0, %s88
    %s103 = sphi 0, %s89
    %s109 = sphi 0, %s111
    %s112 = sphi 0, %s109
    %s113 = sphi 0, %s112
    %s129 = sphi 0, %s113
  $region4: #{blurpool_conv2d.1} parent=0 // loop_header_branch
    %13 = sbr.rel (%p11) target = $region8
  $region5: #{blurpool_conv2d.1} parent=0 // loop_body
    %s15 = ssub.s32 %s10, 1
    %s16 = ssub.s32 %s10, 2
    %s17 = sadd.s32 %s10, 1
    %s18 = ssub.s32 %s10, %s17
    %p19 = scmp.eq.s32.totalorder %s18, 0
    %s21 = sadd.s32 %s20, 1
    %s22 = scalar_select %p19, %s20, %s21
    %p25 = pneg %p19
    %p26 = scmp.eq.s32.totalorder %s10, 1
    %p27 = por %p25, %p26
    %p28 = scmp.ne.s32.totalorder %s20, %s23
    %p29 = scmp.eq.s32.totalorder %s10, 0
    %p30 = por %p28, %p29
    %p31 = scmp.ne.s32.totalorder %s20, %s23
    %p32 = scmp.eq.s32.totalorder %s15, 1
    %p33 = por %p31, %p32
    %p34 = scmp.ne.s32.totalorder %s23, %s24
    %p35 = scmp.eq.s32.totalorder %s15, 0
    %p36 = por %p34, %p35
    %p37 = scmp.ne.s32.totalorder %s23, %s24
    %p38 = scmp.eq.s32.totalorder %s16, 1
    %p39 = por %p37, %p38
    %p41 = scmp.ne.s32.totalorder %s24, %s40
    %p42 = scmp.eq.s32.totalorder %s16, 0
    %p43 = por %p41, %p42
    %s45 = sadd.s32 %s44, 1
    %p48 = scmp.eq.s32.totalorder %s10, 1
    %p49 = scmp.ne.s32.totalorder %s44, %s46
    %p50 = scmp.eq.s32.totalorder %s10, 0
    %p51 = por %p49, %p50
    %p52 = scmp.ne.s32.totalorder %s44, %s46
    %p53 = scmp.eq.s32.totalorder %s15, 1
    %p54 = por %p52, %p53
    %p55 = scmp.ne.s32.totalorder %s46, %s47
    %p56 = scmp.eq.s32.totalorder %s15, 0
    %p57 = por %p55, %p56
    %p58 = scmp.ne.s32.totalorder %s46, %s47
    %p59 = scmp.eq.s32.totalorder %s16, 1
    %p60 = por %p58, %p59
    %p62 = scmp.ne.s32.totalorder %s47, %s61
    %p63 = scmp.eq.s32.totalorder %s16, 0
    %p64 = por %p62, %p63
    %s66 = sadd.s32 %s65, 1
    %p69 = scmp.eq.s32.totalorder %s10, 1
    %p70 = scmp.ne.s32.totalorder %s65, %s67
    %p71 = scmp.eq.s32.totalorder %s10, 0
    %p72 = por %p70, %p71
    %p73 = scmp.ne.s32.totalorder %s65, %s67
    %p74 = scmp.eq.s32.totalorder %s15, 1
    %p75 = por %p73, %p74
    %p76 = scmp.ne.s32.totalorder %s67, %s68
    %p77 = scmp.eq.s32.totalorder %s15, 0
    %p78 = por %p76, %p77
    %p79 = scmp.ne.s32.totalorder %s67, %s68
    %p80 = scmp.eq.s32.totalorder %s16, 1
    %p81 = por %p79, %p80
    %p83 = scmp.ne.s32.totalorder %s68, %s82
    %p84 = scmp.eq.s32.totalorder %s16, 0
    %p85 = por %p83, %p84
    %s87 = sadd.s32 %s86, 1
    %p90 = scmp.eq.s32.totalorder %s10, 1
    %p91 = scmp.ne.s32.totalorder %s86, %s88
    %p92 = scmp.eq.s32.totalorder %s10, 0
    %p93 = por %p91, %p92
    %p94 = scmp.ne.s32.totalorder %s86, %s88
    %p95 = scmp.eq.s32.totalorder %s15, 1
    %p96 = por %p94, %p95
    %p97 = scmp.ne.s32.totalorder %s88, %s89
    %p98 = scmp.eq.s32.totalorder %s15, 0
    %p99 = por %p97, %p98
    %p100 = scmp.ne.s32.totalorder %s88, %s89
    %p101 = scmp.eq.s32.totalorder %s16, 1
    %p102 = por %p100, %p101
    %p104 = scmp.ne.s32.totalorder %s89, %s103
    %p105 = scmp.eq.s32.totalorder %s16, 0
    %p106 = por %p104, %p105
    %s107 = ssub.s32 %s10, %s17
    %p108 = scmp.eq.s32.totalorder %s107, 0
    %s110 = sadd.s32 %s109, 1
    %s111 = scalar_select %p108, %s109, %s110
    %p114 = pneg %p108
    %p115 = scmp.eq.s32.totalorder %s10, 1
    %p116 = por %p114, %p115
    %p117 = scmp.ne.s32.totalorder %s109, %s112
    %p118 = scmp.eq.s32.totalorder %s10, 0
    %p119 = por %p117, %p118
    %p120 = scmp.ne.s32.totalorder %s109, %s112
    %p121 = scmp.eq.s32.totalorder %s15, 1
    %p122 = por %p120, %p121
    %p123 = scmp.ne.s32.totalorder %s112, %s113
    %p124 = scmp.eq.s32.totalorder %s15, 0
    %p125 = por %p123, %p124
    %p126 = scmp.ne.s32.totalorder %s112, %s113
    %p127 = scmp.eq.s32.totalorder %s16, 1
    %p128 = por %p126, %p127
    %p130 = scmp.ne.s32.totalorder %s113, %s129
    %p131 = scmp.eq.s32.totalorder %s16, 0
    %p132 = por %p130, %p131
    %p133 = scmp.le.s32.totalorder 1, %s10
    %p134 = scmp.lt.s32.totalorder %s10, 3
    %p135 = pnand %p133, %p134
    %p136 = pneg %p135
    // Predicated region
    $region9: #{blurpool_conv2d.1} parent=5 // pred_check
      _
    $region10: #{blurpool_conv2d.1} parent=5 // pred_check_branch
      %138 = sbr.rel (%p135) target = $region12
    $region11: #{blurpool_conv2d.1} parent=5 // pred_region
      %s139 = ssub.s32 %s10, 1
      // Predicated region
      $region13: #{blurpool_conv2d.1} parent=11 // pred_check
        %p140 = pneg %p57
      $region14: #{blurpool_conv2d.1} parent=11 // pred_check_branch
        %142 = sbr.rel (%p140) target = $region16
      $region15: #{blurpool_conv2d.1} parent=11 // pred_region
        _
      $region16: #{blurpool_conv2d.1} parent=11 // pred_fallthru
        _
      // Predicated region
      $region17: #{blurpool_conv2d.1} parent=11 // pred_check
        %p143 = pneg %p78
      $region18: #{blurpool_conv2d.1} parent=11 // pred_check_branch
        %145 = sbr.rel (%p143) target = $region20
      $region19: #{blurpool_conv2d.1} parent=11 // pred_region
        _
      $region20: #{blurpool_conv2d.1} parent=11 // pred_fallthru
        _
      // Predicated region
      $region21: #{blurpool_conv2d.1} parent=11 // pred_check
        %p146 = pneg %p99
      $region22: #{blurpool_conv2d.1} parent=11 // pred_check_branch
        %148 = sbr.rel (%p146) target = $region24
      $region23: #{blurpool_conv2d.1} parent=11 // pred_region
        _
      $region24: #{blurpool_conv2d.1} parent=11 // pred_fallthru
        _
    $region12: #{blurpool_conv2d.1} parent=5 // pred_fallthru
      _
    %p149 = scmp.lt.s32.totalorder %s10, 2
    // Predicated region
    $region25: #{blurpool_conv2d.1} parent=5 // pred_check
      %p150 = pneg %p149
    $region26: #{blurpool_conv2d.1} parent=5 // pred_check_branch
      %152 = sbr.rel (%p150) target = $region28
    $region27: #{blurpool_conv2d.1} parent=5 // pred_region
      // Predicated region
      $region29: #{blurpool_conv2d.1} parent=27 // pred_check
        %p153 = pneg %p30
      $region30: #{blurpool_conv2d.1} parent=27 // pred_check_branch
        %155 = sbr.rel (%p153) target = $region32
      $region31: #{blurpool_conv2d.1} parent=27 // pred_region
        %p156 = scmp.lt.s32.totalorder %s10, 1
        %s157 = scalar_select %p156, %s10, 1
        %s158 = smul.addr %s157, 2
        %s159 = smul.addr %s158, 8
        %s160 = scalar_lea.vmem %s0, %s159
      $region32: #{blurpool_conv2d.1} parent=27 // pred_fallthru
        _
    $region28: #{blurpool_conv2d.1} parent=5 // pred_fallthru
      _
    %p161 = scmp.le.s32.totalorder 1, %s10
    %p162 = scmp.lt.s32.totalorder %s10, 3
    %p163 = pnand %p161, %p162
    %p164 = pneg %p163
    // Predicated region
    $region33: #{blurpool_conv2d.1} parent=5 // pred_check
      _
    $region34: #{blurpool_conv2d.1} parent=5 // pred_check_branch
      %166 = sbr.rel (%p163) target = $region36
    $region35: #{blurpool_conv2d.1} parent=5 // pred_region
      %s167 = ssub.s32 %s10, 1
      %p168 = scmp.lt.s32.totalorder %s15, 1
      %s169 = scalar_select %p168, %s15, 1
      %s170 = smul.addr %s169, 2
      %s171 = smul.addr %s170, 8
      %s172 = scalar_lea.vmem %s0, %s171
      %p173 = pneg %p36
      %p174 = pneg %p33
      %p175 = pneg %p57
      %p176 = pneg %p54
      %p177 = pneg %p78
      %p178 = pneg %p75
      %p179 = pneg %p99
      %p180 = pneg %p96
      %p181 = pneg %p125
      %p182 = pneg %p122
      %p183 = scmp.lt.s32.totalorder %s15, 1
      %s184 = scalar_select %p183, %s15, 1
      %s185 = smul.addr %s184, 2
      %s186 = smul.addr %s185, 8
      %s187 = scalar_lea.vmem %s4, %s186
      %p188 = scmp.lt.s32.totalorder %s15, 1
      %s189 = scalar_select %p188, %s15, 1
      %s190 = smul.addr %s189, 2
      %s191 = smul.addr %s190, 8
      %s192 = scalar_lea.vmem %s0, %s191
      %p193 = scmp.lt.s32.totalorder %s15, 1
      %s194 = scalar_select %p193, %s15, 1
      %s195 = smul.addr %s194, 2
      %s196 = smul.addr %s195, 8
      %s197 = scalar_lea.vmem %s4, %s196
      %v198 = vld [vmem:[%s192] sm:$0xff]
      %v199 = vld [vmem:[%s192 + $0x8] sm:$0xff]
      %v200 = vld [vmem:[%s1] sm:$0xff]
      %v201 = vld [vmem:[%s1 + $0x8] sm:$0xff]
      %vm202 = vcmask 130048
      %v204 = vsel %vm202, %v200, 0
      %v207 = vsel %vm202, %v201, 0
      %209 = vmatprep.subr.mxu0 0.0
      %210 = vmatpush1.msra.mxu0 %v198
      %211 = vmatprep.subr.mxu0 0.0
      %212 = vmatpush1.msra.mxu0 %v199
      %213 = vmatprep.subr.mxu0 0.0
      %214 = vmatpush1.msra.mxu0 0.0
      %215 = vmatprep.subr.mxu0 0.0
      %216 = vmatpush1.msra.mxu0 0.0
      %217 = vmatprep.subr.mxu0 0.0
      %218 = vmatpush1.msra.mxu0 0.0
      %219 = vmatprep.subr.mxu0 0.0
      %220 = vmatpush1.msra.mxu0 0.0
      %221 = vmatprep.subr.mxu0 0.0
      %222 = vmatpush1.msra.mxu0 0.0
      %223 = vmatprep.subr.mxu0 0.0
      %224 = vmatpush1.msra.mxu0 0.0
      %225 = vmatprep.subr.mxu0 0.0
      %226 = vmatpush1.msra.mxu0 0.0
      %227 = vmatprep.subr.mxu0 0.0
      %228 = vmatpush1.msra.mxu0 0.0
      %229 = vmatprep.subr.mxu0 0.0
      %230 = vmatpush1.msra.mxu0 0.0
      %231 = vmatprep.subr.mxu0 0.0
      %232 = vmatpush1.msra.mxu0 0.0
      %233 = vmatprep.subr.mxu0 0.0
      %234 = vmatpush1.msra.mxu0 0.0
      %235 = vmatprep.subr.mxu0 0.0
      %236 = vmatpush1.msra.mxu0 0.0
      %237 = vmatprep.subr.mxu0 0.0
      %238 = vmatpush1.msra.mxu0 0.0
      %239 = vmatprep.subr.mxu0 0.0
      %240 = vmatpush1.msra.mxu0 0.0
      %241 = vmatprep.subr.mxu0 0.0
      %242 = vmatpush1.msra.mxu0 0.0
      %243 = vmatprep.subr.mxu0 0.0
      %244 = vmatpush1.msra.mxu0 0.0
      %245 = vmatprep.subr.mxu0 0.0
      %246 = vmatpush1.msra.mxu0 0.0
      %247 = vmatprep.subr.mxu0 0.0
      %248 = vmatpush1.msra.mxu0 0.0
      %249 = vmatprep.subr.mxu0 0.0
      %250 = vmatpush1.msra.mxu0 0.0
      %251 = vmatprep.subr.mxu0 0.0
      %252 = vmatpush1.msra.mxu0 0.0
      %253 = vmatprep.subr.mxu0 0.0
      %254 = vmatpush1.msra.mxu0 0.0
      %255 = vmatprep.subr.mxu0 0.0
      %256 = vmatpush1.msra.mxu0 0.0
      %257 = vmatprep.subr.mxu0 0.0
      %258 = vmatpush1.msra.mxu0 0.0
      %259 = vmatprep.subr.mxu0 0.0
      %260 = vmatpush1.msra.mxu0 0.0
      %261 = vmatprep.subr.mxu0 0.0
      %262 = vmatpush1.msra.mxu0 0.0
      %263 = vmatprep.subr.mxu0 0.0
      %264 = vmatpush1.msra.mxu0 0.0
      %265 = vmatprep.subr.mxu0 0.0
      %266 = vmatpush1.msra.mxu0 0.0
      %267 = vmatprep.subr.mxu0 0.0
      %268 = vmatpush1.msra.mxu0 0.0
      %269 = vmatprep.subr.mxu0 0.0
      %270 = vmatpush1.msra.mxu0 0.0
      %271 = vmatprep.subr.mxu0 0.0
      %272 = vmatpush1.msra.mxu0 0.0
      %273 = vmatprep.mubr.f32.mxu0 0.0
      %274 = vmatmul.mubr.f32.gmra.mrb[0].mxu0 %v204
      %v275 = vpop.f32.mrb[0].mxu0
      %v276 = vadd.f32 0.0, %v275
      %v277 = vpop.f32.mrb[0].mxu0
      %278 = vmatprep.mubr.f32.mxu0 0.0
      %279 = vmatmul.mubr.f32.gmra.mrb[0].mxu0 %v207
      %v280 = vpop.f32.mrb[0].mxu0
      %v281 = vadd.f32 0.0, %v280
      %v282 = vpop.f32.mrb[0].mxu0
      %283 = vdwg.mxu0
      %v284 = vld [vmem:[%s2] sm:$0xff]
      %v285 = vld [vmem:[%s2 + $0x8] sm:$0xff]
      %v286 = vld [vmem:[%s2 + $0x10] sm:$0xff]
      %v287 = vld [vmem:[%s2 + $0x18] sm:$0xff]
      %v288 = vld [vmem:[%s2 + $0x20] sm:$0xff]
      %v289 = vld [vmem:[%s2 + $0x28] sm:$0xff]
      %v290 = vld [vmem:[%s2 + $0x30] sm:$0xff]
      %v291 = vld [vmem:[%s2 + $0x38] sm:$0xff]
      %s292 = scalar_lea.vmem %s1, 16
      %v293 = vld [vmem:[%s292] sm:$0xff]
      %v294 = vld [vmem:[%s292 + $0x8] sm:$0xff]
      %v296 = vsel %vm202, %v293, 0
      %v299 = vsel %vm202, %v294, 0
      %301 = vmatprep.subr.mxu0 0.0
      %302 = vmatpush1.msra.mxu0 %v198
      %303 = vmatprep.subr.mxu0 0.0
      %304 = vmatpush1.msra.mxu0 %v199
      %305 = vmatprep.subr.mxu0 0.0
      %306 = vmatpush1.msra.mxu0 0.0
      %307 = vmatprep.subr.mxu0 0.0
      %308 = vmatpush1.msra.mxu0 0.0
      %309 = vmatprep.subr.mxu0 0.0
      %310 = vmatpush1.msra.mxu0 0.0
      %311 = vmatprep.subr.mxu0 0.0
      %312 = vmatpush1.msra.mxu0 0.0
      %313 = vmatprep.subr.mxu0 0.0
      %314 = vmatpush1.msra.mxu0 0.0
      %315 = vmatprep.subr.mxu0 0.0
      %316 = vmatpush1.msra.mxu0 0.0
      %317 = vmatprep.subr.mxu0 0.0
      %318 = vmatpush1.msra.mxu0 0.0
      %319 = vmatprep.subr.mxu0 0.0
      %320 = vmatpush1.msra.mxu0 0.0
      %321 = vmatprep.subr.mxu0 0.0
      %322 = vmatpush1.msra.mxu0 0.0
      %323 = vmatprep.subr.mxu0 0.0
      %324 = vmatpush1.msra.mxu0 0.0
      %325 = vmatprep.subr.mxu0 0.0
      %326 = vmatpush1.msra.mxu0 0.0
      %327 = vmatprep.subr.mxu0 0.0
      %328 = vmatpush1.msra.mxu0 0.0
      %329 = vmatprep.subr.mxu0 0.0
      %330 = vmatpush1.msra.mxu0 0.0
      %331 = vmatprep.subr.mxu0 0.0
      %332 = vmatpush1.msra.mxu0 0.0
      %333 = vmatprep.subr.mxu0 0.0
      %334 = vmatpush1.msra.mxu0 0.0
      %335 = vmatprep.subr.mxu0 0.0
      %336 = vmatpush1.msra.mxu0 0.0
      %337 = vmatprep.subr.mxu0 0.0
      %338 = vmatpush1.msra.mxu0 0.0
      %339 = vmatprep.subr.mxu0 0.0
      %340 = vmatpush1.msra.mxu0 0.0
      %341 = vmatprep.subr.mxu0 0.0
      %342 = vmatpush1.msra.mxu0 0.0
      %343 = vmatprep.subr.mxu0 0.0
      %344 = vmatpush1.msra.mxu0 0.0
      %345 = vmatprep.subr.mxu0 0.0
      %346 = vmatpush1.msra.mxu0 0.0
      %347 = vmatprep.subr.mxu0 0.0
      %348 = vmatpush1.msra.mxu0 0.0
      %349 = vmatprep.subr.mxu0 0.0
      %350 = vmatpush1.msra.mxu0 0.0
      %351 = vmatprep.subr.mxu0 0.0
      %352 = vmatpush1.msra.mxu0 0.0
      %353 = vmatprep.subr.mxu0 0.0
      %354 = vmatpush1.msra.mxu0 0.0
      %355 = vmatprep.subr.mxu0 0.0
      %356 = vmatpush1.msra.mxu0 0.0
      %357 = vmatprep.subr.mxu0 0.0
      %358 = vmatpush1.msra.mxu0 0.0
      %359 = vmatprep.subr.mxu0 0.0
      %360 = vmatpush1.msra.mxu0 0.0
      %361 = vmatprep.subr.mxu0 0.0
      %362 = vmatpush1.msra.mxu0 0.0
      %363 = vmatprep.subr.mxu0 0.0
      %364 = vmatpush1.msra.mxu0 0.0
      %365 = vmatprep.mubr.f32.mxu0 0.0
      %366 = vmatmul.mubr.f32.gmra.mrb[0].mxu0 %v296
      %v367 = vpop.f32.mrb[0].mxu0
      %v368 = vadd.f32 0.0, %v367
      %v369 = vpop.f32.mrb[0].mxu0
      %370 = vmatprep.mubr.f32.mxu0 0.0
      %371 = vmatmul.mubr.f32.gmra.mrb[0].mxu0 %v299
      %v372 = vpop.f32.mrb[0].mxu0
      %v373 = vadd.f32 0.0, %v372
      %v374 = vpop.f32.mrb[0].mxu0
      %375 = vdwg.mxu0
      %s376 = scalar_lea.vmem %s2, 64
      %v377 = vld [vmem:[%s376] sm:$0xff]
      %v378 = vld [vmem:[%s376 + $0x8] sm:$0xff]
      %v379 = vld [vmem:[%s376 + $0x10] sm:$0xff]
      %v380 = vld [vmem:[%s376 + $0x18] sm:$0xff]
      %v381 = vld [vmem:[%s376 + $0x20] sm:$0xff]
      %v382 = vld [vmem:[%s376 + $0x28] sm:$0xff]
      %v383 = vld [vmem:[%s376 + $0x30] sm:$0xff]
      %v384 = vld [vmem:[%s376 + $0x38] sm:$0xff]
      %vm385 = vcmask 523264
      %v387 = vsel %vm385, %v368, 0
      %v390 = vsel %vm385, %v373, 0
      %392 = vmatprep.subr.mxu0 0.0
      %393 = vmatpush1.msra.mxu0 %v377
      %394 = vmatprep.subr.mxu0 0.0
      %395 = vmatpush1.msra.mxu0 %v378
      %396 = vmatprep.subr.mxu0 0.0
      %397 = vmatpush1.msra.mxu0 %v379
      %398 = vmatprep.subr.mxu0 0.0
      %399 = vmatpush1.msra.mxu0 %v380
      %400 = vmatprep.subr.mxu0 0.0
      %401 = vmatpush1.msra.mxu0 %v381
      %402 = vmatprep.subr.mxu0 0.0
      %403 = vmatpush1.msra.mxu0 %v382
      %404 = vmatprep.subr.mxu0 0.0
      %405 = vmatpush1.msra.mxu0 %v383
      %406 = vmatprep.subr.mxu0 0.0
      %407 = vmatpush1.msra.mxu0 %v384
      %408 = vmatprep.subr.mxu0 0.0
      %409 = vmatpush1.msra.mxu0 0.0
      %410 = vmatprep.subr.mxu0 0.0
      %411 = vmatpush1.msra.mxu0 0.0
      %412 = vmatprep.subr.mxu0 0.0
      %413 = vmatpush1.msra.mxu0 0.0
      %414 = vmatprep.subr.mxu0 0.0
      %415 = vmatpush1.msra.mxu0 0.0
      %416 = vmatprep.subr.mxu0 0.0
      %417 = vmatpush1.msra.mxu0 0.0
      %418 = vmatprep.subr.mxu0 0.0
      %419 = vmatpush1.msra.mxu0 0.0
      %420 = vmatprep.subr.mxu0 0.0
      %421 = vmatpush1.msra.mxu0 0.0
      %422 = vmatprep.subr.mxu0 0.0
      %423 = vmatpush1.msra.mxu0 0.0
      %424 = vmatprep.subr.mxu0 0.0
      %425 = vmatpush1.msra.mxu0 0.0
      %426 = vmatprep.subr.mxu0 0.0
      %427 = vmatpush1.msra.mxu0 0.0
      %428 = vmatprep.subr.mxu0 0.0
      %429 = vmatpush1.msra.mxu0 0.0
      %430 = vmatprep.subr.mxu0 0.0
      %431 = vmatpush1.msra.mxu0 0.0
      %432 = vmatprep.subr.mxu0 0.0
      %433 = vmatpush1.msra.mxu0 0.0
      %434 = vmatprep.subr.mxu0 0.0
      %435 = vmatpush1.msra.mxu0 0.0
      %436 = vmatprep.subr.mxu0 0.0
      %437 = vmatpush1.msra.mxu0 0.0
      %438 = vmatprep.subr.mxu0 0.0
      %439 = vmatpush1.msra.mxu0 0.0
      %440 = vmatprep.subr.mxu0 0.0
      %441 = vmatpush1.msra.mxu0 0.0
      %442 = vmatprep.subr.mxu0 0.0
      %443 = vmatpush1.msra.mxu0 0.0
      %444 = vmatprep.subr.mxu0 0.0
      %445 = vmatpush1.msra.mxu0 0.0
      %446 = vmatprep.subr.mxu0 0.0
      %447 = vmatpush1.msra.mxu0 0.0
      %448 = vmatprep.subr.mxu0 0.0
      %449 = vmatpush1.msra.mxu0 0.0
      %450 = vmatprep.subr.mxu0 0.0
      %451 = vmatpush1.msra.mxu0 0.0
      %452 = vmatprep.subr.mxu0 0.0
      %453 = vmatpush1.msra.mxu0 0.0
      %454 = vmatprep.subr.mxu0 0.0
      %455 = vmatpush1.msra.mxu0 0.0
      %456 = vmatprep.mubr.f32.mxu0 0.0
      %457 = vmatmul.mubr.f32.gmra.mrb[0].mxu0 %v387
      %v458 = vpop.f32.mrb[0].mxu0
      %v459 = vadd.f32 0.0, %v458
      %v460 = vpop.f32.mrb[0].mxu0
      %461 = vmatprep.mubr.f32.mxu0 0.0
      %462 = vmatmul.mubr.f32.gmra.mrb[0].mxu0 %v390
      %v463 = vpop.f32.mrb[0].mxu0
      %v464 = vadd.f32 0.0, %v463
      %v465 = vpop.f32.mrb[0].mxu0
      %466 = vdwg.mxu0
      %v468 = vsel %vm385, %v276, 0
      %v471 = vsel %vm385, %v281, 0
      %473 = vmatprep.subr.mxu0 0.0
      %474 = vmatpush1.msra.mxu0 %v284
      %475 = vmatprep.subr.mxu0 0.0
      %476 = vmatpush1.msra.mxu0 %v285
      %477 = vmatprep.subr.mxu0 0.0
      %478 = vmatpush1.msra.mxu0 %v286
      %479 = vmatprep.subr.mxu0 0.0
      %480 = vmatpush1.msra.mxu0 %v287
      %481 = vmatprep.subr.mxu0 0.0
      %482 = vmatpush1.msra.mxu0 %v288
      %483 = vmatprep.subr.mxu0 0.0
      %484 = vmatpush1.msra.mxu0 %v289
      %485 = vmatprep.subr.mxu0 0.0
      %486 = vmatpush1.msra.mxu0 %v290
      %487 = vmatprep.subr.mxu0 0.0
      %488 = vmatpush1.msra.mxu0 %v291
      %489 = vmatprep.subr.mxu0 0.0
      %490 = vmatpush1.msra.mxu0 0.0
      %491 = vmatprep.subr.mxu0 0.0
      %492 = vmatpush1.msra.mxu0 0.0
      %493 = vmatprep.subr.mxu0 0.0
      %494 = vmatpush1.msra.mxu0 0.0
      %495 = vmatprep.subr.mxu0 0.0
      %496 = vmatpush1.msra.mxu0 0.0
      %497 = vmatprep.subr.mxu0 0.0
      %498 = vmatpush1.msra.mxu0 0.0
      %499 = vmatprep.subr.mxu0 0.0
      %500 = vmatpush1.msra.mxu0 0.0
      %501 = vmatprep.subr.mxu0 0.0
      %502 = vmatpush1.msra.mxu0 0.0
      %503 = vmatprep.subr.mxu0 0.0
      %504 = vmatpush1.msra.mxu0 0.0
      %505 = vmatprep.subr.mxu0 0.0
      %506 = vmatpush1.msra.mxu0 0.0
      %507 = vmatprep.subr.mxu0 0.0
      %508 = vmatpush1.msra.mxu0 0.0
      %509 = vmatprep.subr.mxu0 0.0
      %510 = vmatpush1.msra.mxu0 0.0
      %511 = vmatprep.subr.mxu0 0.0
      %512 = vmatpush1.msra.mxu0 0.0
      %513 = vmatprep.subr.mxu0 0.0
      %514 = vmatpush1.msra.mxu0 0.0
      %515 = vmatprep.subr.mxu0 0.0
      %516 = vmatpush1.msra.mxu0 0.0
      %517 = vmatprep.subr.mxu0 0.0
      %518 = vmatpush1.msra.mxu0 0.0
      %519 = vmatprep.subr.mxu0 0.0
      %520 = vmatpush1.msra.mxu0 0.0
      %521 = vmatprep.subr.mxu0 0.0
      %522 = vmatpush1.msra.mxu0 0.0
      %523 = vmatprep.subr.mxu0 0.0
      %524 = vmatpush1.msra.mxu0 0.0
      %525 = vmatprep.subr.mxu0 0.0
      %526 = vmatpush1.msra.mxu0 0.0
      %527 = vmatprep.subr.mxu0 0.0
      %528 = vmatpush1.msra.mxu0 0.0
      %529 = vmatprep.subr.mxu0 0.0
      %530 = vmatpush1.msra.mxu0 0.0
      %531 = vmatprep.subr.mxu0 0.0
      %532 = vmatpush1.msra.mxu0 0.0
      %533 = vmatprep.subr.mxu0 0.0
      %534 = vmatpush1.msra.mxu0 0.0
      %535 = vmatprep.subr.mxu0 0.0
      %536 = vmatpush1.msra.mxu0 0.0
      %537 = vmatprep.mubr.f32.mxu0 0.0
      %538 = vmatmul.mubr.f32.gmra.mrb[0].mxu0 %v468
      %v539 = vpop.f32.mrb[0].mxu0
      %v540 = vadd.f32 %v459, %v539
      %v541 = vpop.f32.mrb[0].mxu0
      %542 = vmatprep.mubr.f32.mxu0 0.0
      %543 = vmatmul.mubr.f32.gmra.mrb[0].mxu0 %v471
      %v544 = vpop.f32.mrb[0].mxu0
      %v545 = vadd.f32 %v464, %v544
      %v546 = vpop.f32.mrb[0].mxu0
      %547 = vdwg.mxu0
      %s548 = scalar_lea.vmem %s1, 32
      %v549 = vld [vmem:[%s548] sm:$0xff]
      %v550 = vld [vmem:[%s548 + $0x8] sm:$0xff]
      %v552 = vsel %vm202, %v549, 0
      %v555 = vsel %vm202, %v550, 0
      %557 = vmatprep.subr.mxu0 0.0
      %558 = vmatpush1.msra.mxu0 %v198
      %559 = vmatprep.subr.mxu0 0.0
      %560 = vmatpush1.msra.mxu0 %v199
      %561 = vmatprep.subr.mxu0 0.0
      %562 = vmatpush1.msra.mxu0 0.0
      %563 = vmatprep.subr.mxu0 0.0
      %564 = vmatpush1.msra.mxu0 0.0
      %565 = vmatprep.subr.mxu0 0.0
      %566 = vmatpush1.msra.mxu0 0.0
      %567 = vmatprep.subr.mxu0 0.0
      %568 = vmatpush1.msra.mxu0 0.0
      %569 = vmatprep.subr.mxu0 0.0
      %570 = vmatpush1.msra.mxu0 0.0
      %571 = vmatprep.subr.mxu0 0.0
      %572 = vmatpush1.msra.mxu0 0.0
      %573 = vmatprep.subr.mxu0 0.0
      %574 = vmatpush1.msra.mxu0 0.0
      %575 = vmatprep.subr.mxu0 0.0
      %576 = vmatpush1.msra.mxu0 0.0
      %577 = vmatprep.subr.mxu0 0.0
      %578 = vmatpush1.msra.mxu0 0.0
      %579 = vmatprep.subr.mxu0 0.0
      %580 = vmatpush1.msra.mxu0 0.0
      %581 = vmatprep.subr.mxu0 0.0
      %582 = vmatpush1.msra.mxu0 0.0
      %583 = vmatprep.subr.mxu0 0.0
      %584 = vmatpush1.msra.mxu0 0.0
      %585 = vmatprep.subr.mxu0 0.0
      %586 = vmatpush1.msra.mxu0 0.0
      %587 = vmatprep.subr.mxu0 0.0
      %588 = vmatpush1.msra.mxu0 0.0
      %589 = vmatprep.subr.mxu0 0.0
      %590 = vmatpush1.msra.mxu0 0.0
      %591 = vmatprep.subr.mxu0 0.0
      %592 = vmatpush1.msra.mxu0 0.0
      %593 = vmatprep.subr.mxu0 0.0
      %594 = vmatpush1.msra.mxu0 0.0
      %595 = vmatprep.subr.mxu0 0.0
      %596 = vmatpush1.msra.mxu0 0.0
      %597 = vmatprep.subr.mxu0 0.0
      %598 = vmatpush1.msra.mxu0 0.0
      %599 = vmatprep.subr.mxu0 0.0
      %600 = vmatpush1.msra.mxu0 0.0
      %601 = vmatprep.subr.mxu0 0.0
      %602 = vmatpush1.msra.mxu0 0.0
      %603 = vmatprep.subr.mxu0 0.0
      %604 = vmatpush1.msra.mxu0 0.0
      %605 = vmatprep.subr.mxu0 0.0
      %606 = vmatpush1.msra.mxu0 0.0
      %607 = vmatprep.subr.mxu0 0.0
      %608 = vmatpush1.msra.mxu0 0.0
      %609 = vmatprep.subr.mxu0 0.0
      %610 = vmatpush1.msra.mxu0 0.0
      %611 = vmatprep.subr.mxu0 0.0
      %612 = vmatpush1.msra.mxu0 0.0
      %613 = vmatprep.subr.mxu0 0.0
      %614 = vmatpush1.msra.mxu0 0.0
      %615 = vmatprep.subr.mxu0 0.0
      %616 = vmatpush1.msra.mxu0 0.0
      %617 = vmatprep.subr.mxu0 0.0
      %618 = vmatpush1.msra.mxu0 0.0
      %619 = vmatprep.subr.mxu0 0.0
      %620 = vmatpush1.msra.mxu0 0.0
      %621 = vmatprep.mubr.f32.mxu0 0.0
      %622 = vmatmul.mubr.f32.gmra.mrb[0].mxu0 %v552
      %v623 = vpop.f32.mrb[0].mxu0
      %v624 = vadd.f32 0.0, %v623
      %v625 = vpop.f32.mrb[0].mxu0
      %626 = vmatprep.mubr.f32.mxu0 0.0
      %627 = vmatmul.mubr.f32.gmra.mrb[0].mxu0 %v555
      %v628 = vpop.f32.mrb[0].mxu0
      %v629 = vadd.f32 0.0, %v628
      %v630 = vpop.f32.mrb[0].mxu0
      %631 = vdwg.mxu0
      %s632 = scalar_lea.vmem %s2, 128
      %v633 = vld [vmem:[%s632] sm:$0xff]
      %v634 = vld [vmem:[%s632 + $0x8] sm:$0xff]
      %v635 = vld [vmem:[%s632 + $0x10] sm:$0xff]
      %v636 = vld [vmem:[%s632 + $0x18] sm:$0xff]
      %v637 = vld [vmem:[%s632 + $0x20] sm:$0xff]
      %v638 = vld [vmem:[%s632 + $0x28] sm:$0xff]
      %v639 = vld [vmem:[%s632 + $0x30] sm:$0xff]
      %v640 = vld [vmem:[%s632 + $0x38] sm:$0xff]
      %v642 = vsel %vm385, %v624, 0
      %v645 = vsel %vm385, %v629, 0
      %647 = vmatprep.subr.mxu0 0.0
      %648 = vmatpush1.msra.mxu0 %v633
      %649 = vmatprep.subr.mxu0 0.0
      %650 = vmatpush1.msra.mxu0 %v634
      %651 = vmatprep.subr.mxu0 0.0
      %652 = vmatpush1.msra.mxu0 %v635
      %653 = vmatprep.subr.mxu0 0.0
      %654 = vmatpush1.msra.mxu0 %v636
      %655 = vmatprep.subr.mxu0 0.0
      %656 = vmatpush1.msra.mxu0 %v637
      %657 = vmatprep.subr.mxu0 0.0
      %658 = vmatpush1.msra.mxu0 %v638
      %659 = vmatprep.subr.mxu0 0.0
      %660 = vmatpush1.msra.mxu0 %v639
      %661 = vmatprep.subr.mxu0 0.0
      %662 = vmatpush1.msra.mxu0 %v640
      %663 = vmatprep.subr.mxu0 0.0
      %664 = vmatpush1.msra.mxu0 0.0
      %665 = vmatprep.subr.mxu0 0.0
      %666 = vmatpush1.msra.mxu0 0.0
      %667 = vmatprep.subr.mxu0 0.0
      %668 = vmatpush1.msra.mxu0 0.0
      %669 = vmatprep.subr.mxu0 0.0
      %670 = vmatpush1.msra.mxu0 0.0
      %671 = vmatprep.subr.mxu0 0.0
      %672 = vmatpush1.msra.mxu0 0.0
      %673 = vmatprep.subr.mxu0 0.0
      %674 = vmatpush1.msra.mxu0 0.0
      %675 = vmatprep.subr.mxu0 0.0
      %676 = vmatpush1.msra.mxu0 0.0
      %677 = vmatprep.subr.mxu0 0.0
      %678 = vmatpush1.msra.mxu0 0.0
      %679 = vmatprep.subr.mxu0 0.0
      %680 = vmatpush1.msra.mxu0 0.0
      %681 = vmatprep.subr.mxu0 0.0
      %682 = vmatpush1.msra.mxu0 0.0
      %683 = vmatprep.subr.mxu0 0.0
      %684 = vmatpush1.msra.mxu0 0.0
      %685 = vmatprep.subr.mxu0 0.0
      %686 = vmatpush1.msra.mxu0 0.0
      %687 = vmatprep.subr.mxu0 0.0
      %688 = vmatpush1.msra.mxu0 0.0
      %689 = vmatprep.subr.mxu0 0.0
      %690 = vmatpush1.msra.mxu0 0.0
      %691 = vmatprep.subr.mxu0 0.0
      %692 = vmatpush1.msra.mxu0 0.0
      %693 = vmatprep.subr.mxu0 0.0
      %694 = vmatpush1.msra.mxu0 0.0
      %695 = vmatprep.subr.mxu0 0.0
      %696 = vmatpush1.msra.mxu0 0.0
      %697 = vmatprep.subr.mxu0 0.0
      %698 = vmatpush1.msra.mxu0 0.0
      %699 = vmatprep.subr.mxu0 0.0
      %700 = vmatpush1.msra.mxu0 0.0
      %701 = vmatprep.subr.mxu0 0.0
      %702 = vmatpush1.msra.mxu0 0.0
      %703 = vmatprep.subr.mxu0 0.0
      %704 = vmatpush1.msra.mxu0 0.0
      %705 = vmatprep.subr.mxu0 0.0
      %706 = vmatpush1.msra.mxu0 0.0
      %707 = vmatprep.subr.mxu0 0.0
      %708 = vmatpush1.msra.mxu0 0.0
      %709 = vmatprep.subr.mxu0 0.0
      %710 = vmatpush1.msra.mxu0 0.0
      %711 = vmatprep.mubr.f32.mxu0 0.0
      %712 = vmatmul.mubr.f32.gmra.mrb[0].mxu0 %v642
      %v713 = vpop.f32.mrb[0].mxu0
      %v714 = vadd.f32 0.0, %v713
      %v715 = vpop.f32.mrb[0].mxu0
      %716 = vmatprep.mubr.f32.mxu0 0.0
      %717 = vmatmul.mubr.f32.gmra.mrb[0].mxu0 %v645
      %v718 = vpop.f32.mrb[0].mxu0
      %v719 = vadd.f32 0.0, %v718
      %v720 = vpop.f32.mrb[0].mxu0
      %721 = vdwg.mxu0
      %v722 = vadd.f32 %v540, %v714
      %v723 = vadd.f32 %v545, %v719
      %v724 = vld [vmem:[%s3] sm:$0x1]
      %v726 = vlaneseq
      %v727 = vshrl.u32 %v726, 7
      %v728 = vsub.s32 0, %v727
      %v729 = vrot.slane %v724, %v728
      %v731 = vadd.f32 %v722, %v729
      %v732 = vadd.f32 %v723, %v729
      %733 = vst [vmem:[%s197] sm:$0xff] %v731
      %734 = vst [vmem:[%s197 + $0x8] sm:$0xff] %v732
      %p735 = scmp.lt.s32.totalorder %s15, 1
      %s736 = scalar_select %p735, %s15, 1
      %s737 = smul.addr %s736, 2
      %s738 = smul.addr %s737, 8
      %s739 = scalar_lea.vmem %s4, %s738
      // Predicated region
      $region37: #{blurpool_conv2d.1} parent=35 // pred_check
        %p740 = pneg %p122
      $region38: #{blurpool_conv2d.1} parent=35 // pred_check_branch
        %742 = sbr.rel (%p740) target = $region40
      $region39: #{blurpool_conv2d.1} parent=35 // pred_region
        _
      $region40: #{blurpool_conv2d.1} parent=35 // pred_fallthru
        _
    $region36: #{blurpool_conv2d.1} parent=5 // pred_fallthru
      _
    %p743 = scmp.le.s32.totalorder 2, %s10
    // Predicated region
    $region41: #{blurpool_conv2d.1} parent=5 // pred_check
      %p744 = pneg %p743
    $region42: #{blurpool_conv2d.1} parent=5 // pred_check_branch
      %746 = sbr.rel (%p744) target = $region44
    $region43: #{blurpool_conv2d.1} parent=5 // pred_region
      %s747 = ssub.s32 %s10, 2
      // Predicated region
      $region45: #{blurpool_conv2d.1} parent=43 // pred_check
        %p748 = pneg %p128
      $region46: #{blurpool_conv2d.1} parent=43 // pred_check_branch
        %750 = sbr.rel (%p748) target = $region48
      $region47: #{blurpool_conv2d.1} parent=43 // pred_region
        %p751 = scmp.lt.s32.totalorder %s16, 1
        %s752 = scalar_select %p751, %s16, 1
        %s753 = smul.addr %s752, 2
        %s754 = smul.addr %s753, 8
        %s755 = scalar_lea.vmem %s4, %s754
      $region48: #{blurpool_conv2d.1} parent=43 // pred_fallthru
        _
    $region44: #{blurpool_conv2d.1} parent=5 // pred_fallthru
      _
  $region6: #{blurpool_conv2d.1} parent=0 // loop_footer
    %s14 = sadd.s32 1, %s10
  $region7: #{blurpool_conv2d.1} parent=0 // loop_footer_branch
    %9 = sbr.rel target = $region3
  $region8: #{blurpool_conv2d.1} parent=0 // loop_exit
    _

</llo_original>
